<compile_context>
chip_gen: v5e
topology: v5e:2x2
jax: 0.10.0
libtpu: 0.0.40
codegen_flags: <defaults>
</compile_context>

<pallas_src>
import jax
import jax.numpy as jnp
from jax.experimental import pallas as pl
from jax.experimental.pallas import tpu as pltpu

_LANES = 128
_SUBLANES = 8


def _l1_partial_kernel(sr_ref, hr_ref, acc_ref):
    """Accumulate per-(sublane, lane) partial sums of |SR - HR| into acc_ref."""
    step = pl.program_id(0)

    @pl.when(step == 0)
    def _():
        acc_ref[...] = jnp.zeros_like(acc_ref)

    # Cast to f32 *inside* the kernel so sub-32-bit inputs keep their native
    # (smaller) HBM footprint; all accumulation is f32.
    d = jnp.abs(sr_ref[...].astype(jnp.float32) - hr_ref[...].astype(jnp.float32))
    tile_rows = d.shape[0]
    # (tile_rows, 128) -> (tile_rows//8, 8, 128), sum over the leading axis:
    # the trailing (8, 128) is an exact vreg tile, so this is pure VPU adds.
    acc_ref[...] += jnp.sum(
        d.reshape(tile_rows // _SUBLANES, _SUBLANES, _LANES), axis=0)


def _round_up(x, m):
    return (x + m - 1) // m * m


def l1_loss(sr, hr, *, target_block_bytes=1 << 20):
    """mean(|sr - hr|) over all elements, computed in a single Pallas kernel."""
    assert sr.shape == hr.shape, (sr.shape, hr.shape)
    total = sr.size

    # Common compute-friendly storage dtype (no-op for matching float inputs).
    dtype = jnp.promote_types(sr.dtype, hr.dtype)
    if dtype not in (jnp.float32, jnp.bfloat16, jnp.float16):
        dtype = jnp.float32
    sr = sr.astype(dtype)
    hr = hr.astype(dtype)
    itemsize = jnp.dtype(dtype).itemsize

    # Sublane multiple required for packed dtypes: 8 (f32), 16 (bf16/f16).
    sub = _SUBLANES * max(1, 4 // itemsize)

    # Lane-dense view: (rows, 128), rows a multiple of the sublane multiple.
    rows = _round_up(pl.cdiv(total, _LANES), sub)

    # ~1 MiB per input block (2048 rows f32 / 4096 rows bf16); with two
    # inputs double-buffered that is ~4 MiB of VMEM -- safe on v5e/v6e/v7x.
    cap = max(sub, (target_block_bytes // (_LANES * itemsize)) // sub * sub)
    tile_rows = min(cap, rows)
    rows_padded = _round_up(rows, tile_rows)
    padded_total = rows_padded * _LANES

    sr_flat = jnp.ravel(sr)
    hr_flat = jnp.ravel(hr)
    pad = padded_total - total
    if pad:
        # Identical zero padding in both operands contributes nothing to the sum.
        sr_flat = jnp.pad(sr_flat, (0, pad))
        hr_flat = jnp.pad(hr_flat, (0, pad))
    sr2 = sr_flat.reshape(rows_padded, _LANES)
    hr2 = hr_flat.reshape(rows_padded, _LANES)

    grid = (rows_padded // tile_rows,)
    partials = pl.pallas_call(
        _l1_partial_kernel,
        out_shape=jax.ShapeDtypeStruct((_SUBLANES, _LANES), jnp.float32),
        grid=grid,
        in_specs=[
            pl.BlockSpec((tile_rows, _LANES), lambda i: (i, 0)),
            pl.BlockSpec((tile_rows, _LANES), lambda i: (i, 0)),
        ],
        # Same block index every step -> VMEM-resident accumulator, one
        # HBM writeback at the end of the grid.
        out_specs=pl.BlockSpec((_SUBLANES, _LANES), lambda i: (0, 0)),
        compiler_params=pltpu.CompilerParams(
            dimension_semantics=("arbitrary",)),
    )(sr2, hr2)

    # Tiny finishing reduction (1024 elems) + mean normalization, all f32.
    return jnp.sum(partials) / jnp.float32(total)


def get_loss(sr, hr):
    # Mirrors get_loss.forward(SR, HR) -> torch.nn.L1Loss()(SR, HR)
    return l1_loss(sr, hr)


if __name__ == "__main__":
    key = jax.random.PRNGKey(0)
    k_sr, k_hr = jax.random.split(key)
    shape = (2, 4, 16, 16)   # (batch, channels, H, W)
    sr = jax.random.normal(k_sr, shape, jnp.float32)
    hr = jax.random.normal(k_hr, shape, jnp.float32)

    loss_fn = jax.jit(get_loss)
    loss = jax.block_until_ready(loss_fn(sr, hr))

    ref = jnp.mean(jnp.abs(sr - hr))
    assert loss.shape == ()
    assert bool(jnp.isfinite(loss))
    assert jnp.allclose(loss, ref, rtol=1e-6, atol=1e-6), (loss, ref)
    print("KERNEL_OK")
</pallas_src>

<mosaic_0001>
module attributes {stable_mosaic.version = 11 : i64} {
  func.func @_l1_partial_kernel(%arg0: i32, %arg1: memref<16x128xf32, #tpu.memory_space<vmem>>, %arg2: memref<16x128xf32, #tpu.memory_space<vmem>>, %arg3: memref<8x128xf32, #tpu.memory_space<vmem>>) attributes {dimension_semantics = [#tpu.dimension_semantics<arbitrary>], iteration_bounds = array<i64: 1>, scalar_prefetch = 0 : i64, scratch_operands = 0 : i64, tpu.core_type = #tpu.core_type<tc>, window_params = [{transform_indices = @transform_0, window_bounds = array<i64: 16, 128>}, {transform_indices = @transform_1, window_bounds = array<i64: 16, 128>}, {pipeline_mode = #tpu.pipeline_mode<synchronous>, transform_indices = @transform_2, window_bounds = array<i64: 8, 128>}]} {
    %c0_i32 = arith.constant 0 : i32
    %0 = arith.cmpi eq, %arg0, %c0_i32 : i32
    %1 = arith.extui %0 : i1 to i32
    %c0_i32_0 = arith.constant 0 : i32
    %2 = arith.cmpi ne, %1, %c0_i32_0 : i32
    scf.if %2 {
      %cst_8 = arith.constant 0.000000e+00 : f32
      %12 = vector.broadcast %cst_8 : f32 to vector<8x128xf32>
      %c0_9 = arith.constant 0 : index
      %c0_10 = arith.constant 0 : index
      %13 = vector.load %arg3[%c0_9, %c0_10] : memref<8x128xf32, #tpu.memory_space<vmem>>, vector<8x128xf32>
      tpu.vector_store %arg3[%c0_9, %c0_10], %12 {strides = array<i32>} : memref<8x128xf32, #tpu.memory_space<vmem>>, vector<8x128xf32>,
    } else {
    }
    %c0 = arith.constant 0 : index
    %c0_1 = arith.constant 0 : index
    %3 = vector.load %arg1[%c0, %c0_1] : memref<16x128xf32, #tpu.memory_space<vmem>>, vector<16x128xf32>
    %c0_2 = arith.constant 0 : index
    %c0_3 = arith.constant 0 : index
    %4 = vector.load %arg2[%c0_2, %c0_3] : memref<16x128xf32, #tpu.memory_space<vmem>>, vector<16x128xf32>
    %5 = arith.subf %3, %4 : vector<16x128xf32>
    %6 = math.absf %5 : vector<16x128xf32>
    %c0_4 = arith.constant 0 : index
    %c0_5 = arith.constant 0 : index
    %7 = vector.load %arg3[%c0_4, %c0_5] : memref<8x128xf32, #tpu.memory_space<vmem>>, vector<8x128xf32>
    %8 = vector.shape_cast %6 : vector<16x128xf32> to vector<2x8x128xf32>
    %cst = arith.constant dense<0.000000e+00> : vector<8x128xf32>
    %9 = vector.multi_reduction <add>, %8, %cst [0] : vector<2x8x128xf32> to vector<8x128xf32>
    %10 = arith.addf %7, %9 : vector<8x128xf32>
    %c0_6 = arith.constant 0 : index
    %c0_7 = arith.constant 0 : index
    %11 = vector.load %arg3[%c0_6, %c0_7] : memref<8x128xf32, #tpu.memory_space<vmem>>, vector<8x128xf32>
    tpu.vector_store %arg3[%c0_6, %c0_7], %10 {strides = array<i32>} : memref<8x128xf32, #tpu.memory_space<vmem>>, vector<8x128xf32>,
    return
  }
  func.func @transform_0(%arg0: i32) -> (i32, i32) {
    %c0_i32 = arith.constant 0 : i32
    %c0_i32_0 = arith.constant 0 : i32
    return %arg0, %c0_i32 : i32, i32
  }
  func.func @transform_1(%arg0: i32) -> (i32, i32) {
    %c0_i32 = arith.constant 0 : i32
    %c0_i32_0 = arith.constant 0 : i32
    return %arg0, %c0_i32 : i32, i32
  }
  func.func @transform_2(%arg0: i32) -> (i32, i32) {
    %c0_i32 = arith.constant 0 : i32
    %c0_i32_0 = arith.constant 0 : i32
    %c0_i32_1 = arith.constant 0 : i32
    return %c0_i32, %c0_i32_0 : i32, i32
  }
}

</mosaic_0001>

<llo_original>
// kernel: get_loss.1
$region0: #{get_loss.1}
  #allocation0 [shape = 'u32[]', space=smem, size = 0x4, offset = 0x4, fixed_abs, tag = 'smem constant byte address 0x4 - core index']
  #allocation1 [shape = 'u32[72,128]{1,0:T(1,128)}', space=vmem, size = 0x9000, scoped, tag = 'internal scratch']
  %s0 = inlined_call_operand.vmem [shape: f32[16,128], index: 0, kind: input, shape index: {}]
  %s1 = inlined_call_operand.vmem [shape: f32[16,128], index: 1, kind: input, shape index: {}]
  %s2 = inlined_call_operand.vmem [shape: f32[8,128], index: 2, kind: output, shape index: {}]
  %s3 = sld [smem:[#allocation0]]
  $region22: #{get_loss.1} parent=0
    _
  %s5 = ssub.s32 1, %s3
  %s6 = scalar_select 0, %s5, %s3
  // Predicated region
  $region2: #{get_loss.1} parent=0 // pred_check
    _
  $region3: #{get_loss.1} parent=0 // pred_check_branch
    %8 = sbr.rel (0) target = $region5
  $region4: #{get_loss.1} parent=0 // pred_region
    _
  $region5: #{get_loss.1} parent=0 // pred_fallthru
    _
  // Predicated region
  $region6: #{get_loss.1} parent=0 // pred_check
    _
  $region7: #{get_loss.1} parent=0 // pred_check_branch
    %10 = sbr.rel (0) target = $region9
  $region8: #{get_loss.1} parent=0 // pred_region
    _
  $region9: #{get_loss.1} parent=0 // pred_fallthru
    _
  %p11 = scmp.eq.s32.totalorder 0, 0
  // Predicated region
  $region10: #{get_loss.1} parent=0 // pred_check
    %p12 = pneg %p11
  $region11: #{get_loss.1} parent=0 // pred_check_branch
    %14 = sbr.rel (%p12) target = $region13
  $region12: #{get_loss.1} parent=0 // pred_region
    %15 = vst [vmem:[%s2] sm:$0xff] 0.0
  $region13: #{get_loss.1} parent=0 // pred_fallthru
    _
  %v16 = vld [vmem:[%s0] sm:$0xff]
  %v17 = vld [vmem:[%s0 + $0x8] sm:$0xff]
  %v18 = vld [vmem:[%s1] sm:$0xff]
  %v19 = vld [vmem:[%s1 + $0x8] sm:$0xff]
  %v20 = vsub.f32 %v16, %v18
  %v21 = vsub.f32 %v17, %v19
  %v22 = vand.u32 2147483647, %v20
  %v23 = vand.u32 2147483647, %v21
  %v24 = vld [vmem:[%s2] sm:$0xff]
  %v25 = vadd.f32 %v22, %v23
  %v26 = vadd.f32 %v24, %v25
  %27 = vst [vmem:[%s2] sm:$0xff] %v26
  // Predicated region
  $region14: #{get_loss.1} parent=0 // pred_check
    _
  $region15: #{get_loss.1} parent=0 // pred_check_branch
    %29 = sbr.rel (0) target = $region17
  $region16: #{get_loss.1} parent=0 // pred_region
    _
  $region17: #{get_loss.1} parent=0 // pred_fallthru
    _
  // Predicated region
  $region18: #{get_loss.1} parent=0 // pred_check
    _
  $region19: #{get_loss.1} parent=0 // pred_check_branch
    %31 = sbr.rel (0) target = $region21
  $region20: #{get_loss.1} parent=0 // pred_region
    _
  $region21: #{get_loss.1} parent=0 // pred_fallthru
    _

</llo_original>
